<compile_context>
chip_gen: v5e
topology: v5e:2x2
jax: 0.10.0
libtpu: 0.0.40
codegen_flags: <defaults>
</compile_context>

<pallas_src>
import math

import jax
import jax.numpy as jnp
from jax.experimental import pallas as pl
from jax.experimental.pallas import tpu as pltpu

_EPS = 1e-6  # nn.CosineSimilarity(eps=1e-06)


# ---------------------------------------------------------------------------
# Kernel: per-pair cosine similarity.
# Input block : (TILE_P, 2*D) — row p is [x1_p | x2_p] (free reshape of two
#               consecutive logits rows).
# Output block: (TILE_P, 1) cosine similarity per pair.
# ---------------------------------------------------------------------------
def _pair_cos_kernel(x_ref, out_ref):
    d2 = x_ref.shape[-1]
    d = d2 // 2
    # Static contiguous lane slices: no strided deinterleave, no sublane shuffles.
    x1 = x_ref[:, :d].astype(jnp.float32)   # (TILE_P, D)
    x2 = x_ref[:, d:].astype(jnp.float32)   # (TILE_P, D)

    dot = jnp.sum(x1 * x2, axis=-1, keepdims=True)   # (TILE_P, 1)
    n1sq = jnp.sum(x1 * x1, axis=-1, keepdims=True)
    n2sq = jnp.sum(x2 * x2, axis=-1, keepdims=True)

    # dot * rsqrt(max(n1sq*n2sq, eps^2)) == dot / max(|x1|*|x2|, eps)  (norms >= 0).
    denom_sq = jnp.maximum(n1sq * n2sq, _EPS * _EPS)
    out_ref[...] = dot * jax.lax.rsqrt(denom_sq)     # rsqrt -> EUP slot (free-ish)


# ---------------------------------------------------------------------------
# Generation-aware tile sizing.
# ---------------------------------------------------------------------------
def _round_up(x, m):
    return ((x + m - 1) // m) * m


def _vmem_capacity_bytes():
    """Physical per-core VMEM; conservative 64 MiB (v7x) fallback."""
    try:
        info = pltpu.get_tpu_info()
        for attr in ("vmem_capacity_bytes", "vmem_bytes", "vmem_size_bytes"):
            cap = getattr(info, attr, None)
            if cap and int(cap) >= (16 << 20):
                return int(cap)
    except Exception:
        pass
    return 64 << 20


def _choose_tile_p(num_pairs, dim, itemsize):
    """Pairs per block so double-buffered input + f32 intermediates fit VMEM."""
    cap = _vmem_capacity_bytes()
    # Usable budget: leave headroom for Mosaic internals / output buffers.
    # v7x (64 MiB)  -> ~48 MiB;  v5e/v6e (128 MiB) -> ~96 MiB.
    budget = max(min(cap - (16 << 20), int(cap * 0.75)), 16 << 20)
    # Per-pair working set: 2x (double buffer) input row (2*D*itemsize, real bf16 size)
    # + f32 intermediates (x1, x2 upcasts + one product temporary).
    per_pair = 2 * (2 * dim * int(itemsize)) + 3 * dim * 4
    tile = max(int(budget // per_pair), 8)
    tile = min(tile, 4096, num_pairs)

    # Guarantee >=2 (ideally >=4) grid steps: needed for DMA/compute overlap and for
    # the "parallel" grid axis to use both v7x TensorCores.
    if num_pairs >= 32:
        tile = min(tile, _round_up(pl.cdiv(num_pairs, 4), 8))
    elif num_pairs >= 16:
        tile = min(tile, _round_up(pl.cdiv(num_pairs, 2), 8))

    if tile < num_pairs:
        tile = max(8, (tile // 8) * 8)   # keep blocks sublane-aligned
    else:
        tile = num_pairs                 # full-extent block is always legal
    return tile


def pairwise_cosine_similarity(logits, *, tile_p=None):
    """logits: (B, D), pairs in consecutive rows. Returns (B//2, 1) f32 cos-sim."""
    B, D = logits.shape
    assert B % 2 == 0, "batch must be even (paired rows)"
    P = B // 2
    itemsize = int(jnp.dtype(logits.dtype).itemsize)
    if tile_p is None:
        tile_p = _choose_tile_p(P, D, itemsize)
    grid = (pl.cdiv(P, tile_p),)

    # Free (metadata-only) reshape: row p = [logits[2p] | logits[2p+1]].  No HBM copy.
    paired = logits.reshape(P, 2 * D)

    cap = _vmem_capacity_bytes()
    in_block_bytes = tile_p * 2 * D * itemsize
    temp_bytes = 3 * tile_p * D * 4            # f32 upcasts + product temporary
    vmem_limit = 2 * in_block_bytes + temp_bytes + (4 << 20)
    vmem_limit = int(min(max(vmem_limit, 32 << 20), int(cap * 0.90)))

    cost = pl.CostEstimate(
        flops=6 * P * D,                       # 3 reductions x (mul + add) per element
        transcendentals=P,                     # one rsqrt per pair
        bytes_accessed=B * D * itemsize + P * 4,
    )

    return pl.pallas_call(
        _pair_cos_kernel,
        out_shape=jax.ShapeDtypeStruct((P, 1), jnp.float32),
        grid=grid,
        in_specs=[pl.BlockSpec((tile_p, 2 * D), lambda i: (i, 0))],
        out_specs=pl.BlockSpec((tile_p, 1), lambda i: (i, 0)),
        compiler_params=pltpu.CompilerParams(
            dimension_semantics=("parallel",),   # shard tiles across v7x's 2 TCs
            vmem_limit_bytes=vmem_limit,
        ),
        cost_estimate=cost,
    )(paired)


# ---------------------------------------------------------------------------
# Glue (plain JAX, tiny (B//2,) vectors) — mirrors ArcScoreCriterion exactly.
# ---------------------------------------------------------------------------
def _windowing(x, window_type, p):
    if window_type == 'identity':
        return x
    elif window_type == 'pow':
        return jnp.power(x, p)
    elif window_type == 'original':
        return jnp.cos(math.pi * (1.0 - x))
    elif window_type == 'linear':
        return 2.0 * x - 1.0
    elif window_type == 'log':
        return jnp.log(2.0 * x) / math.log(2.0)
    elif window_type == 'quadratic':
        return -4.0 * jnp.square(x - 1.0) + 1.0
    else:
        raise ValueError(f'{window_type} not supported!')


def arc_score_loss(logits, labels, ctype='arc', window_type='identity', pow_=1,
                   tile_p=None):
    cos = pairwise_cosine_similarity(logits, tile_p=tile_p)[:, 0]   # (B//2,)
    cos = jnp.clip(cos, -1.0, 1.0)                                  # arccos NaN guard
    sim_score = 1.0 - jnp.arccos(cos) / math.pi
    sim_score = _windowing(sim_score, window_type, pow_)
    labels = labels.astype(jnp.float32)
    if ctype == 'square_arc':
        pred, tgt = jnp.square(sim_score), jnp.square(labels)
    else:
        pred, tgt = sim_score, labels
    # MSE left to XLA: it fuses with the arccos/windowing elementwise ops above.
    return jnp.mean(jnp.square(pred - tgt))


# Pure-JAX reference for verification (same math, no Pallas).
def _arc_score_loss_ref(logits, labels):
    bs, dim = logits.shape[0], logits.shape[-1]
    pairs = jnp.reshape(logits, (bs // 2, 2, dim))
    x1, x2 = pairs[:, 0, :], pairs[:, 1, :]
    dot = jnp.sum(x1 * x2, axis=-1)
    denom = jnp.maximum(jnp.linalg.norm(x1, axis=-1) * jnp.linalg.norm(x2, axis=-1),
                        _EPS)
    sim_score = 1.0 - jnp.arccos(jnp.clip(dot / denom, -1.0, 1.0)) / math.pi
    return jnp.mean(jnp.square(sim_score - labels.astype(jnp.float32)))


if __name__ == "__main__":
    key = jax.random.PRNGKey(0)
    k1, k2, k3, k4, k5, k6 = jax.random.split(key, 6)

    # Case 1: small shapes, single block (tile_p == num_pairs).
    B, D = 8, 32
    logits = jax.random.normal(k1, (B, D), dtype=jnp.float32)
    labels = jax.random.uniform(k2, (B // 2,), dtype=jnp.float32)
    loss = jax.block_until_ready(jax.jit(arc_score_loss)(logits, labels))
    ref = _arc_score_loss_ref(logits, labels)
    assert jnp.allclose(loss, ref, atol=1e-5, rtol=1e-5), (loss, ref)

    # Case 2: multi-block, exercises the pipelined grid (grid=(4,), tile_p=8).
    B2, D2 = 64, 128
    logits2 = jax.random.normal(k3, (B2, D2), dtype=jnp.float32)
    labels2 = jax.random.uniform(k4, (B2 // 2,), dtype=jnp.float32)
    loss2 = jax.block_until_ready(
        jax.jit(lambda lg, lb: arc_score_loss(lg, lb, tile_p=8))(logits2, labels2))
    ref2 = _arc_score_loss_ref(logits2, labels2)
    assert jnp.allclose(loss2, ref2, atol=1e-5, rtol=1e-5), (loss2, ref2)

    # Case 3: ragged last tile (P=20 not divisible by tile_p=8).
    B3, D3 = 40, 64
    logits3 = jax.random.normal(k5, (B3, D3), dtype=jnp.float32)
    labels3 = jax.random.uniform(k6, (B3 // 2,), dtype=jnp.float32)
    loss3 = jax.block_until_ready(
        jax.jit(lambda lg, lb: arc_score_loss(lg, lb, tile_p=8))(logits3, labels3))
    ref3 = _arc_score_loss_ref(logits3, labels3)
    assert jnp.allclose(loss3, ref3, atol=1e-5, rtol=1e-5), (loss3, ref3)

    print("KERNEL_OK")
</pallas_src>

<mosaic_0001>
module attributes {stable_mosaic.version = 11 : i64} {
  func.func @_pair_cos_kernel(%arg0: i32, %arg1: memref<4x64xf32, #tpu.memory_space<vmem>>, %arg2: memref<4x1xf32, #tpu.memory_space<vmem>>) attributes {dimension_semantics = [#tpu.dimension_semantics<parallel>], iteration_bounds = array<i64: 1>, scalar_prefetch = 0 : i64, scratch_operands = 0 : i64, tpu.core_type = #tpu.core_type<tc>, window_params = [{transform_indices = @transform_0, window_bounds = array<i64: 4, 64>}, {transform_indices = @transform_1, window_bounds = array<i64: 4, 1>}]} {
    %c0 = arith.constant 0 : index
    %c0_0 = arith.constant 0 : index
    %0 = vector.load %arg1[%c0, %c0_0] : memref<4x64xf32, #tpu.memory_space<vmem>>, vector<4x32xf32>
    %c0_1 = arith.constant 0 : index
    %c32 = arith.constant 32 : index
    %1 = vector.load %arg1[%c0_1, %c32] : memref<4x64xf32, #tpu.memory_space<vmem>>, vector<4x32xf32>
    %2 = arith.mulf %0, %1 : vector<4x32xf32>
    %cst = arith.constant dense<0.000000e+00> : vector<4xf32>
    %3 = vector.multi_reduction <add>, %2, %cst [1] : vector<4x32xf32> to vector<4xf32>
    %4 = vector.shape_cast %3 : vector<4xf32> to vector<4x1xf32>
    %5 = arith.mulf %0, %0 : vector<4x32xf32>
    %cst_2 = arith.constant dense<0.000000e+00> : vector<4xf32>
    %6 = vector.multi_reduction <add>, %5, %cst_2 [1] : vector<4x32xf32> to vector<4xf32>
    %7 = vector.shape_cast %6 : vector<4xf32> to vector<4x1xf32>
    %8 = arith.mulf %1, %1 : vector<4x32xf32>
    %cst_3 = arith.constant dense<0.000000e+00> : vector<4xf32>
    %9 = vector.multi_reduction <add>, %8, %cst_3 [1] : vector<4x32xf32> to vector<4xf32>
    %10 = vector.shape_cast %9 : vector<4xf32> to vector<4x1xf32>
    %11 = arith.mulf %7, %10 : vector<4x1xf32>
    %cst_4 = arith.constant 9.99999996E-13 : f32
    %12 = vector.broadcast %cst_4 : f32 to vector<4x1xf32>
    %13 = arith.maximumf %11, %12 : vector<4x1xf32>
    %14 = math.rsqrt %13 : vector<4x1xf32>
    %15 = arith.mulf %4, %14 : vector<4x1xf32>
    %c0_5 = arith.constant 0 : index
    %c0_6 = arith.constant 0 : index
    %16 = vector.load %arg2[%c0_5, %c0_6] : memref<4x1xf32, #tpu.memory_space<vmem>>, vector<4x1xf32>
    tpu.vector_store %arg2[%c0_5, %c0_6], %15 {strides = array<i32>} : memref<4x1xf32, #tpu.memory_space<vmem>>, vector<4x1xf32>,
    return
  }
  func.func @transform_0(%arg0: i32) -> (i32, i32) {
    %c0_i32 = arith.constant 0 : i32
    %c0_i32_0 = arith.constant 0 : i32
    return %arg0, %c0_i32 : i32, i32
  }
  func.func @transform_1(%arg0: i32) -> (i32, i32) {
    %c0_i32 = arith.constant 0 : i32
    %c0_i32_0 = arith.constant 0 : i32
    return %arg0, %c0_i32 : i32, i32
  }
}

</mosaic_0001>

<llo_original>
// kernel: arc_score_loss.1
$region0: #{arc_score_loss.1}
  #allocation0 [shape = 'u32[]', space=smem, size = 0x4, offset = 0x4, fixed_abs, tag = 'smem constant byte address 0x4 - core index']
  #allocation1 [shape = 'u32[72,128]{1,0:T(1,128)}', space=vmem, size = 0x9000, scoped, tag = 'internal scratch']
  %s0 = inlined_call_operand.vmem [shape: f32[4,64], index: 0, kind: input, shape index: {}]
  %s1 = inlined_call_operand.vmem [shape: f32[4,1], index: 1, kind: output, shape index: {}]
  %s2 = sld [smem:[#allocation0]]
  $region14: #{arc_score_loss.1} parent=0
    _
  %s4 = ssub.s32 1, %s2
  %s5 = scalar_select 0, %s4, %s2
  // Predicated region
  $region2: #{arc_score_loss.1} parent=0 // pred_check
    _
  $region3: #{arc_score_loss.1} parent=0 // pred_check_branch
    %7 = sbr.rel (0) target = $region5
  $region4: #{arc_score_loss.1} parent=0 // pred_region
    _
  $region5: #{arc_score_loss.1} parent=0 // pred_fallthru
    _
  %v8 = vld [vmem:[%s0] sm:$0xf]
  %10 = vrot.lane.b32.xlu0 %v8, 96
  %v11 = vpop.permute.xlu0 %10
  %v13 = vmul.f32 %v8, %v11
  %vm14 = vcmask 257024
  %v15 = vsel %vm14, %v13, 0.0
  %16 = vadd.xlane.f32.xlu0 %v15
  %v17 = vpop.xlane.xlu0 %16
  %v18 = vmul.f32 %v8, %v8
  %v19 = vsel %vm14, %v18, 0.0
  %20 = vadd.xlane.f32.xlu0 %v19
  %v21 = vpop.xlane.xlu0 %20
  %23 = vrot.lane.b32.xlu0 %v18, 96
  %v24 = vpop.permute.xlu0 %23
  %v26 = vsel %vm14, %v24, 0.0
  %27 = vadd.xlane.f32.xlu0 %v26
  %v28 = vpop.xlane.xlu0 %27
  %v29 = vmul.f32 %v21, %v28
  %v30 = vmax.f32 %v29, 1e-12
  %v31 = vrsqrt.pop %v30
  %v32 = vmul.f32 %v31, %v30
  %v33 = vmul.f32 %v32, %v31
  %v34 = vmul.f32 0.5, %v33
  %v35 = vsub.f32 1.5, %v34
  %v36 = vmul.f32 %v31, %v35
  %vm37 = vweird.f32 %v30
  %vm38 = vweird.f32 %v31
  %vm39 = vmor %vm37, %vm38
  %v40 = vsel %vm39, %v31, %v36
  %v41 = vmul.f32 %v17, %v40
  %vm42 = vcmask 3072
  %43 = vst.msk [vmem:[%s1] sm:$0xf] %vm42, %v41
  // Predicated region
  $region6: #{arc_score_loss.1} parent=0 // pred_check
    _
  $region7: #{arc_score_loss.1} parent=0 // pred_check_branch
    %45 = sbr.rel (0) target = $region9
  $region8: #{arc_score_loss.1} parent=0 // pred_region
    _
  $region9: #{arc_score_loss.1} parent=0 // pred_fallthru
    _
  // Predicated region
  $region10: #{arc_score_loss.1} parent=0 // pred_check
    _
  $region11: #{arc_score_loss.1} parent=0 // pred_check_branch
    %47 = sbr.rel (0) target = $region13
  $region12: #{arc_score_loss.1} parent=0 // pred_region
    _
  $region13: #{arc_score_loss.1} parent=0 // pred_fallthru
    _

</llo_original>
